<compile_context>
chip_gen: v5e
topology: v5e:2x2
jax: 0.10.0
libtpu: 0.0.40
codegen_flags: <defaults>
</compile_context>

<pallas_src>
import jax
import jax.numpy as jnp
from jax.experimental import pallas as pl
from jax.experimental.pallas import tpu as pltpu


def _round_up(n, m):
    return ((n + m - 1) // m) * m


def mlp_kernel(x_ref, w1_ref, b1_ref, w2_ref, b2_ref, w3_ref, b3_ref, o_ref):
    # Cast x to bf16 in-kernel (free on the VPU, hidden under the input DMA).
    x = x_ref[...].astype(jnp.bfloat16)
    # Layer 1: bf16 operands, f32 MXU accumulation; bias + ReLU epilogue in f32.
    h = jnp.dot(x, w1_ref[...], preferred_element_type=jnp.float32)
    h = jnp.maximum(h + b1_ref[...], 0.0)
    # Layer 2.
    h = jnp.dot(h.astype(jnp.bfloat16), w2_ref[...],
                preferred_element_type=jnp.float32)
    h = jnp.maximum(h + b2_ref[...], 0.0)
    # Output layer (no nonlinearity). Output block is (tb, sysid_dim) —
    # full last dim, no lane padding, minimal HBM writeback.
    o = jnp.dot(h.astype(jnp.bfloat16), w3_ref[...],
                preferred_element_type=jnp.float32)
    o_ref[...] = (o + b3_ref[...]).astype(o_ref.dtype)


def prepare_params(params):
    """One-time weight conversion (hoisted out of the per-call hot path)."""
    return {
        "w1": params["w1"].astype(jnp.bfloat16),
        "w2": params["w2"].astype(jnp.bfloat16),
        "w3": params["w3"].astype(jnp.bfloat16),
        "b1": params["b1"].astype(jnp.float32),
        "b2": params["b2"].astype(jnp.float32),
        "b3": params["b3"].astype(jnp.float32),
    }


def direct_sysid_forward(x, params, *, block_batch=2048, min_grid_steps=1):
    """x: (batch, history_dim) f32; params: raw f32 or prepare_params() output.

    Returns (batch, sysid_dim) f32.  On v7x, pass min_grid_steps=2 for large
    batches so both TensorCores get work.
    """
    # bf16 weights (no-op if params were already prepared), f32 biases.
    w1 = params["w1"].astype(jnp.bfloat16)
    w2 = params["w2"].astype(jnp.bfloat16)
    w3 = params["w3"].astype(jnp.bfloat16)
    b1 = params["b1"].astype(jnp.float32)
    b2 = params["b2"].astype(jnp.float32)
    b3 = params["b3"].astype(jnp.float32)

    batch, history_dim = x.shape
    sysid_dim = w3.shape[1]

    # --- adaptive batch tiling (<=15 rows of padding, tb multiple of 16) ----
    num_tiles = max(min_grid_steps, pl.cdiv(batch, block_batch))
    tb = _round_up(pl.cdiv(batch, num_tiles), 16)
    b_pad = num_tiles * tb
    x_p = x if b_pad == batch else jnp.pad(x, ((0, b_pad - batch), (0, 0)))
    grid = (num_tiles,)

    def const_spec(shape):
        # Full-array block, same block every grid step -> stays VMEM-resident.
        return pl.BlockSpec(shape, lambda i: tuple(0 for _ in shape))

    out = pl.pallas_call(
        mlp_kernel,
        out_shape=jax.ShapeDtypeStruct((b_pad, sysid_dim), jnp.float32),
        grid=grid,
        in_specs=[
            pl.BlockSpec((tb, history_dim), lambda i: (i, 0)),   # x tile (f32)
            const_spec(w1.shape),
            const_spec(b1.shape),
            const_spec(w2.shape),
            const_spec(b2.shape),
            const_spec(w3.shape),
            const_spec(b3.shape),
        ],
        out_specs=pl.BlockSpec((tb, sysid_dim), lambda i: (i, 0)),
        compiler_params=pltpu.CompilerParams(
            dimension_semantics=("parallel",)),
    )(x_p, w1, b1, w2, b2, w3, b3)

    return out if b_pad == batch else out[:batch]


def init_params(key, history_dim, sysid_dim, layer_sizes):
    """Deterministic synthetic init (shapes match the nn.Linear layers)."""
    dims = [history_dim] + list(layer_sizes) + [sysid_dim]
    keys = jax.random.split(key, 2 * (len(dims) - 1))
    params = {}
    for i in range(len(dims) - 1):
        fan_in, fan_out = dims[i], dims[i + 1]
        scale = 1.0 / jnp.sqrt(fan_in)
        params[f"w{i+1}"] = scale * jax.random.normal(
            keys[2 * i], (fan_in, fan_out), dtype=jnp.float32)
        params[f"b{i+1}"] = scale * jax.random.normal(
            keys[2 * i + 1], (1, fan_out), dtype=jnp.float32)
    return params


def reference_forward_f32(x, params):
    h = jnp.maximum(x @ params["w1"] + params["b1"], 0.0)
    h = jnp.maximum(h @ params["w2"] + params["b2"], 0.0)
    return h @ params["w3"] + params["b3"]


def reference_forward_bf16(x, params):
    """Matches the kernel's bf16-operand / f32-accumulate numerics."""
    def mm(a, w):
        return jnp.dot(a.astype(jnp.bfloat16), w.astype(jnp.bfloat16),
                       preferred_element_type=jnp.float32)
    h = jnp.maximum(mm(x, params["w1"]) + params["b1"], 0.0)
    h = jnp.maximum(mm(h, params["w2"]) + params["b2"], 0.0)
    return mm(h, params["w3"]) + params["b3"]


if __name__ == "__main__":
    # Small shapes consistent with the module:
    # history_dim=32 input, two hidden layers of 64, sysid_dim=16 output.
    batch, history_dim, sysid_dim = 8, 32, 16
    layer_sizes = [64, 64]

    key = jax.random.PRNGKey(0)
    kx, kp = jax.random.split(key)
    x = jax.random.normal(kx, (batch, history_dim), dtype=jnp.float32)
    params = init_params(kp, history_dim, sysid_dim, layer_sizes)

    prepped = prepare_params(params)   # one-time bf16 weight conversion
    out = direct_sysid_forward(x, prepped)
    out = jax.block_until_ready(out)
    assert out.shape == (batch, sysid_dim)

    # Tight check vs. a bf16-matched reference (same matmul numerics).
    ref_bf = reference_forward_bf16(x, params)
    assert jnp.allclose(out, ref_bf, atol=1e-3, rtol=1e-3), \
        "mismatch vs bf16-matched reference"

    # Looser sanity check vs. the full-f32 reference (bf16 operand rounding).
    ref_f32 = reference_forward_f32(x, params)
    assert jnp.allclose(out, ref_f32, atol=5e-2, rtol=5e-2), \
        "mismatch vs f32 reference"

    print("KERNEL_OK")
</pallas_src>

<mosaic_0001>
module attributes {stable_mosaic.version = 11 : i64} {
  func.func @mlp_kernel(%arg0: i32, %arg1: memref<16x32xf32, #tpu.memory_space<vmem>>, %arg2: memref<32x64xbf16, #tpu.memory_space<vmem>>, %arg3: memref<1x64xf32, #tpu.memory_space<vmem>>, %arg4: memref<64x64xbf16, #tpu.memory_space<vmem>>, %arg5: memref<1x64xf32, #tpu.memory_space<vmem>>, %arg6: memref<64x16xbf16, #tpu.memory_space<vmem>>, %arg7: memref<1x16xf32, #tpu.memory_space<vmem>>, %arg8: memref<16x16xf32, #tpu.memory_space<vmem>>) attributes {dimension_semantics = [#tpu.dimension_semantics<parallel>], iteration_bounds = array<i64: 1>, scalar_prefetch = 0 : i64, scratch_operands = 0 : i64, tpu.core_type = #tpu.core_type<tc>, window_params = [{transform_indices = @transform_0, window_bounds = array<i64: 16, 32>}, {pipeline_mode = #tpu.pipeline_mode<synchronous>, transform_indices = @transform_1, window_bounds = array<i64: 32, 64>}, {pipeline_mode = #tpu.pipeline_mode<synchronous>, transform_indices = @transform_2, window_bounds = array<i64: 1, 64>}, {pipeline_mode = #tpu.pipeline_mode<synchronous>, transform_indices = @transform_3, window_bounds = array<i64: 64, 64>}, {pipeline_mode = #tpu.pipeline_mode<synchronous>, transform_indices = @transform_4, window_bounds = array<i64: 1, 64>}, {pipeline_mode = #tpu.pipeline_mode<synchronous>, transform_indices = @transform_5, window_bounds = array<i64: 64, 16>}, {pipeline_mode = #tpu.pipeline_mode<synchronous>, transform_indices = @transform_6, window_bounds = array<i64: 1, 16>}, {transform_indices = @transform_7, window_bounds = array<i64: 16, 16>}]} {
    %c0 = arith.constant 0 : index
    %c0_0 = arith.constant 0 : index
    %0 = vector.load %arg1[%c0, %c0_0] : memref<16x32xf32, #tpu.memory_space<vmem>>, vector<16x32xf32>
    %1 = arith.truncf %0 : vector<16x32xf32> to vector<16x32xbf16>
    %c0_1 = arith.constant 0 : index
    %c0_2 = arith.constant 0 : index
    %2 = vector.load %arg2[%c0_1, %c0_2] : memref<32x64xbf16, #tpu.memory_space<vmem>>, vector<32x64xbf16>
    %cst = arith.constant dense<0.000000e+00> : vector<16x64xf32>
    %3 = tpu.matmul %1, %2, %cst {dimension_numbers = #tpu.dot_dimension_numbers<[1], [0], [0], [1], [0, 0, 1, 1], [], []>} : vector<16x32xbf16>, vector<32x64xbf16>, vector<16x64xf32> -> vector<16x64xf32>
    %c0_3 = arith.constant 0 : index
    %c0_4 = arith.constant 0 : index
    %4 = vector.load %arg3[%c0_3, %c0_4] : memref<1x64xf32, #tpu.memory_space<vmem>>, vector<1x64xf32>
    %5 = vector.broadcast %4 : vector<1x64xf32> to vector<16x64xf32>
    %6 = arith.addf %3, %5 : vector<16x64xf32>
    %cst_5 = arith.constant 0.000000e+00 : f32
    %7 = vector.broadcast %cst_5 : f32 to vector<16x64xf32>
    %8 = arith.maximumf %6, %7 : vector<16x64xf32>
    %9 = arith.truncf %8 : vector<16x64xf32> to vector<16x64xbf16>
    %c0_6 = arith.constant 0 : index
    %c0_7 = arith.constant 0 : index
    %10 = vector.load %arg4[%c0_6, %c0_7] : memref<64x64xbf16, #tpu.memory_space<vmem>>, vector<64x64xbf16>
    %cst_8 = arith.constant dense<0.000000e+00> : vector<16x64xf32>
    %11 = tpu.matmul %9, %10, %cst_8 {dimension_numbers = #tpu.dot_dimension_numbers<[1], [0], [0], [1], [0, 0, 1, 1], [], []>} : vector<16x64xbf16>, vector<64x64xbf16>, vector<16x64xf32> -> vector<16x64xf32>
    %c0_9 = arith.constant 0 : index
    %c0_10 = arith.constant 0 : index
    %12 = vector.load %arg5[%c0_9, %c0_10] : memref<1x64xf32, #tpu.memory_space<vmem>>, vector<1x64xf32>
    %13 = vector.broadcast %12 : vector<1x64xf32> to vector<16x64xf32>
    %14 = arith.addf %11, %13 : vector<16x64xf32>
    %cst_11 = arith.constant 0.000000e+00 : f32
    %15 = vector.broadcast %cst_11 : f32 to vector<16x64xf32>
    %16 = arith.maximumf %14, %15 : vector<16x64xf32>
    %17 = arith.truncf %16 : vector<16x64xf32> to vector<16x64xbf16>
    %c0_12 = arith.constant 0 : index
    %c0_13 = arith.constant 0 : index
    %18 = vector.load %arg6[%c0_12, %c0_13] : memref<64x16xbf16, #tpu.memory_space<vmem>>, vector<64x16xbf16>
    %cst_14 = arith.constant dense<0.000000e+00> : vector<16x16xf32>
    %19 = tpu.matmul %17, %18, %cst_14 {dimension_numbers = #tpu.dot_dimension_numbers<[1], [0], [0], [1], [0, 0, 1, 1], [], []>} : vector<16x64xbf16>, vector<64x16xbf16>, vector<16x16xf32> -> vector<16x16xf32>
    %c0_15 = arith.constant 0 : index
    %c0_16 = arith.constant 0 : index
    %20 = vector.load %arg7[%c0_15, %c0_16] : memref<1x16xf32, #tpu.memory_space<vmem>>, vector<1x16xf32>
    %21 = vector.broadcast %20 : vector<1x16xf32> to vector<16x16xf32>
    %22 = arith.addf %19, %21 : vector<16x16xf32>
    %c0_17 = arith.constant 0 : index
    %c0_18 = arith.constant 0 : index
    %23 = vector.load %arg8[%c0_17, %c0_18] : memref<16x16xf32, #tpu.memory_space<vmem>>, vector<16x16xf32>
    tpu.vector_store %arg8[%c0_17, %c0_18], %22 {strides = array<i32>} : memref<16x16xf32, #tpu.memory_space<vmem>>, vector<16x16xf32>,
    return
  }
  func.func @transform_0(%arg0: i32) -> (i32, i32) {
    %c0_i32 = arith.constant 0 : i32
    %c0_i32_0 = arith.constant 0 : i32
    return %arg0, %c0_i32 : i32, i32
  }
  func.func @transform_1(%arg0: i32) -> (i32, i32) {
    %c0_i32 = arith.constant 0 : i32
    %c0_i32_0 = arith.constant 0 : i32
    %c0_i32_1 = arith.constant 0 : i32
    return %c0_i32, %c0_i32_0 : i32, i32
  }
  func.func @transform_2(%arg0: i32) -> (i32, i32) {
    %c0_i32 = arith.constant 0 : i32
    %c0_i32_0 = arith.constant 0 : i32
    %c0_i32_1 = arith.constant 0 : i32
    return %c0_i32, %c0_i32_0 : i32, i32
  }
  func.func @transform_3(%arg0: i32) -> (i32, i32) {
    %c0_i32 = arith.constant 0 : i32
    %c0_i32_0 = arith.constant 0 : i32
    %c0_i32_1 = arith.constant 0 : i32
    return %c0_i32, %c0_i32_0 : i32, i32
  }
  func.func @transform_4(%arg0: i32) -> (i32, i32) {
    %c0_i32 = arith.constant 0 : i32
    %c0_i32_0 = arith.constant 0 : i32
    %c0_i32_1 = arith.constant 0 : i32
    return %c0_i32, %c0_i32_0 : i32, i32
  }
  func.func @transform_5(%arg0: i32) -> (i32, i32) {
    %c0_i32 = arith.constant 0 : i32
    %c0_i32_0 = arith.constant 0 : i32
    %c0_i32_1 = arith.constant 0 : i32
    return %c0_i32, %c0_i32_0 : i32, i32
  }
  func.func @transform_6(%arg0: i32) -> (i32, i32) {
    %c0_i32 = arith.constant 0 : i32
    %c0_i32_0 = arith.constant 0 : i32
    %c0_i32_1 = arith.constant 0 : i32
    return %c0_i32, %c0_i32_0 : i32, i32
  }
  func.func @transform_7(%arg0: i32) -> (i32, i32) {
    %c0_i32 = arith.constant 0 : i32
    %c0_i32_0 = arith.constant 0 : i32
    return %arg0, %c0_i32 : i32, i32
  }
}

</mosaic_0001>

<llo_original>
// kernel: tpu_custom_call.1
$region0: #{tpu_custom_call.1}
  #allocation0 [shape = 'u32[]', space=smem, size = 0x4, offset = 0x4, fixed_abs, tag = 'smem constant byte address 0x4 - core index']
  #allocation1 [shape = 'u32[72,128]{1,0:T(1,128)}', space=vmem, size = 0x9000, scoped, tag = 'internal scratch']
  %s0 = inlined_call_operand.hbm [shape: f32[16,32], index: 0, kind: input, shape index: {}]
  %s1 = inlined_call_operand.hbm [shape: bf16[32,64], index: 1, kind: input, shape index: {}]
  %s2 = inlined_call_operand.vmem [shape: f32[1,64], index: 2, kind: input, shape index: {}]
  %s3 = inlined_call_operand.vmem [shape: bf16[64,64], index: 3, kind: input, shape index: {}]
  %s4 = inlined_call_operand.vmem [shape: f32[1,64], index: 4, kind: input, shape index: {}]
  %s5 = inlined_call_operand.vmem [shape: bf16[64,16], index: 5, kind: input, shape index: {}]
  %s6 = inlined_call_operand.vmem [shape: f32[1,16], index: 6, kind: input, shape index: {}]
  %s7 = inlined_call_operand.hbm [shape: f32[16,16], index: 7, kind: output, shape index: {}]
  %s8 = sld [smem:[#allocation0]]
  $region46: #{tpu_custom_call.1} parent=0
    _
  %s10 = ssub.s32 1, %s8
  %s11 = scalar_select 0, %s10, %s8
  $region1: #{tpu_custom_call.1} parent=0
    #allocation2 [shape = 'u8[8192]{0}', space=vmem, size = 0x2000, scoped, tag = 'input window, operand 0, single buffered']
    #allocation3 [shape = 's32[1]{0}', space=sflag, size = 0x4, scoped, tag = 'scoped memory for tpu_custom_call.1']
    #allocation4 [shape = 's32[1]{0}', space=sflag, size = 0x4, scoped, tag = 'scoped memory for tpu_custom_call.1']
    #allocation5 [shape = 'u8[8192]{0}', space=vmem, size = 0x2000, scoped, tag = 'input window, operand 1, single buffered']
    #allocation6 [shape = 's32[1]{0}', space=sflag, size = 0x4, scoped, tag = 'scoped memory for tpu_custom_call.1']
    #allocation7 [shape = 'u8[8192]{0}', space=vmem, size = 0x2000, scoped, tag = 'output window, operand 0, single buffered']
    %12 = vsyncpa [#allocation3], 0
    %13 = vsyncpa [#allocation6], 0
    %14 = vsyncpa [#allocation4], 0
    // Predicated region
    $region2: #{tpu_custom_call.1} parent=1 // pred_check
      _
    $region3: #{tpu_custom_call.1} parent=1 // pred_check_branch
      %16 = sbr.rel (0) target = $region5
    $region4: #{tpu_custom_call.1} parent=1 // pred_region
      %18 = vsyncadd [#allocation3], 0
      %s19 = sshll.u32 %s0, 4
      %s20 = int_to_ptr.hbm [resolvable:$true] %s19
      %s21 = sshll.u32 [#allocation2], 4
      %s22 = int_to_ptr.vmem [resolvable:$true] %s21
      %27 = dma.hbm_to_vmem [thread:$0]  %s20, 256, %s22, [#allocation3], 128, 128, 8
    $region5: #{tpu_custom_call.1} parent=1 // pred_fallthru
      _
    // Predicated region
    $region6: #{tpu_custom_call.1} parent=1 // pred_check
      _
    $region7: #{tpu_custom_call.1} parent=1 // pred_check_branch
      %29 = sbr.rel (0) target = $region9
    $region8: #{tpu_custom_call.1} parent=1 // pred_region
      %31 = vsyncadd [#allocation6], 0
      %s32 = sshll.u32 %s1, 4
      %s33 = int_to_ptr.hbm [resolvable:$true] %s32
      %s34 = sshll.u32 [#allocation5], 4
      %s35 = int_to_ptr.vmem [resolvable:$true] %s34
      %40 = dma.hbm_to_vmem [thread:$0]  %s33, 256, %s35, [#allocation6], 64, 64, 4
    $region9: #{tpu_custom_call.1} parent=1 // pred_fallthru
      _
    // Predicated region
    $region10: #{tpu_custom_call.1} parent=1 // pred_check
      _
    $region11: #{tpu_custom_call.1} parent=1 // pred_check_branch
      %42 = sbr.rel (0) target = $region13
    $region12: #{tpu_custom_call.1} parent=1 // pred_region
      _
    $region13: #{tpu_custom_call.1} parent=1 // pred_fallthru
      _
    // Predicated region
    $region14: #{tpu_custom_call.1} parent=1 // pred_check
      _
    $region15: #{tpu_custom_call.1} parent=1 // pred_check_branch
      %44 = sbr.rel (0) target = $region17
    $region16: #{tpu_custom_call.1} parent=1 // pred_region
      _
    $region17: #{tpu_custom_call.1} parent=1 // pred_fallthru
      _
    // Predicated region
    $region18: #{tpu_custom_call.1} parent=1 // pred_check
      _
    $region19: #{tpu_custom_call.1} parent=1 // pred_check_branch
      %46 = sbr.rel (0) target = $region21
    $region20: #{tpu_custom_call.1} parent=1 // pred_region
      _
    $region21: #{tpu_custom_call.1} parent=1 // pred_fallthru
      _
    // Predicated region
    $region22: #{tpu_custom_call.1} parent=1 // pred_check
      _
    $region23: #{tpu_custom_call.1} parent=1 // pred_check_branch
      %48 = sbr.rel (0) target = $region25
    $region24: #{tpu_custom_call.1} parent=1 // pred_region
      _
    $region25: #{tpu_custom_call.1} parent=1 // pred_fallthru
      _
    // Predicated region
    $region26: #{tpu_custom_call.1} parent=1 // pred_check
      _
    $region27: #{tpu_custom_call.1} parent=1 // pred_check_branch
      %50 = sbr.rel (0) target = $region29
    $region28: #{tpu_custom_call.1} parent=1 // pred_region
      _
    $region29: #{tpu_custom_call.1} parent=1 // pred_fallthru
      _
    // Predicated region
    $region30: #{tpu_custom_call.1} parent=1 // pred_check
      _
    $region31: #{tpu_custom_call.1} parent=1 // pred_check_branch
      %52 = sbr.rel (0) target = $region33
    $region32: #{tpu_custom_call.1} parent=1 // pred_region
      %54 = dma.done [#allocation3], 256
    $region33: #{tpu_custom_call.1} parent=1 // pred_fallthru
      _
    // Predicated region
    $region34: #{tpu_custom_call.1} parent=1 // pred_check
      _
    $region35: #{tpu_custom_call.1} parent=1 // pred_check_branch
      %56 = sbr.rel (0) target = $region37
    $region36: #{tpu_custom_call.1} parent=1 // pred_region
      %58 = dma.done [#allocation6], 256
    $region37: #{tpu_custom_call.1} parent=1 // pred_fallthru
      _
    %v60 = vld [vmem:[#allocation2] sm:$0xff]
    %v61 = vld [vmem:[#allocation2 + $0x8] sm:$0xff]
    %v62 = vpack.c.bf16 %v61, %v60
    %v63 = vld [vmem:[#allocation5] sm:$0xf]
    %v64 = vld [vmem:[#allocation5 + $0x4] sm:$0xf]
    %v65 = vld [vmem:[#allocation5 + $0x8] sm:$0xf]
    %v66 = vld [vmem:[#allocation5 + $0xc] sm:$0xf]
    %v67 = vld [vmem:[%s2] sm:$0x1]
    %v69 = vperm.slane %v67, 0
    %v75 = vunpack.c.l.b16 %v63
    %v76 = vunpack.c.l.b16 %v64
    %v77 = vunpack.c.l.b16 %v65
    %v78 = vunpack.c.l.b16 %v66
    %v79 = vpack.c.b16 %v76, %v75
    %v80 = vpack.c.b16 %v78, %v77
    %vm83 = vcmask 261120
    %v85 = vsel %vm83, %v62, 0
    %87 = vmatpush.bf16.msra.mxu0 0
    %88 = vmatpush.bf16.msra.mxu0 0
    %89 = vmatpush.bf16.msra.mxu0 0
    %90 = vmatpush.bf16.msra.mxu0 0
    %91 = vmatpush.bf16.msra.mxu0 0
    %92 = vmatpush.bf16.msra.mxu0 0
    %93 = vmatpush.bf16.msra.mxu0 %v80
    %94 = vmatpush.bf16.msra.mxu0 %v79
    %95 = vmatmul.bf16.gmra.mxu0 %v85
    %v96 = vpop.f32.mrf.mxu0
    %v97 = vadd.f32 %v69, %v96
    %v98 = vpop.f32.mrf.mxu0
    %v99 = vadd.f32 %v69, %v98
    %100 = vdwg.mxu0
    %v101 = vmax.f32 %v97, 0.0
    %v102 = vmax.f32 %v99, 0.0
    %v103 = vpack.c.bf16 %v102, %v101
    %v104 = vld [vmem:[%s3] sm:$0xf]
    %v105 = vld [vmem:[%s3 + $0x4] sm:$0xf]
    %v106 = vld [vmem:[%s3 + $0x8] sm:$0xf]
    %v107 = vld [vmem:[%s3 + $0xc] sm:$0xf]
    %v108 = vld [vmem:[%s3 + $0x10] sm:$0xf]
    %v109 = vld [vmem:[%s3 + $0x14] sm:$0xf]
    %v110 = vld [vmem:[%s3 + $0x18] sm:$0xf]
    %v111 = vld [vmem:[%s3 + $0x1c] sm:$0xf]
    %v112 = vld [vmem:[%s4] sm:$0x1]
    %v114 = vperm.slane %v112, 0
    %v124 = vunpack.c.l.b16 %v104
    %v125 = vunpack.c.l.b16 %v105
    %v126 = vunpack.c.l.b16 %v106
    %v127 = vunpack.c.l.b16 %v107
    %v128 = vunpack.c.l.b16 %v108
    %v129 = vunpack.c.l.b16 %v109
    %v130 = vunpack.c.l.b16 %v110
    %v131 = vunpack.c.l.b16 %v111
    %v132 = vpack.c.b16 %v125, %v124
    %v133 = vpack.c.b16 %v127, %v126
    %v134 = vpack.c.b16 %v129, %v128
    %v135 = vpack.c.b16 %v131, %v130
    %vm140 = vcmask 523264
    %v142 = vsel %vm140, %v103, 0
    %144 = vmatpush.bf16.msra.mxu0 0
    %145 = vmatpush.bf16.msra.mxu0 0
    %146 = vmatpush.bf16.msra.mxu0 0
    %147 = vmatpush.bf16.msra.mxu0 0
    %148 = vmatpush.bf16.msra.mxu0 %v135
    %149 = vmatpush.bf16.msra.mxu0 %v134
    %150 = vmatpush.bf16.msra.mxu0 %v133
    %151 = vmatpush.bf16.msra.mxu0 %v132
    %152 = vmatmul.bf16.gmra.mxu0 %v142
    %v153 = vpop.f32.mrf.mxu0
    %v154 = vadd.f32 %v114, %v153
    %v155 = vpop.f32.mrf.mxu0
    %v156 = vadd.f32 %v114, %v155
    %157 = vdwg.mxu0
    %v158 = vmax.f32 %v154, 0.0
    %v159 = vmax.f32 %v156, 0.0
    %v160 = vpack.c.bf16 %v159, %v158
    %v161 = vld [vmem:[%s5] sm:$0xf]
    %v162 = vld [vmem:[%s5 + $0x4] sm:$0xf]
    %v163 = vld [vmem:[%s5 + $0x8] sm:$0xf]
    %v164 = vld [vmem:[%s5 + $0xc] sm:$0xf]
    %v165 = vld [vmem:[%s5 + $0x10] sm:$0xf]
    %v166 = vld [vmem:[%s5 + $0x14] sm:$0xf]
    %v167 = vld [vmem:[%s5 + $0x18] sm:$0xf]
    %v168 = vld [vmem:[%s5 + $0x1c] sm:$0xf]
    %v169 = vld [vmem:[%s6] sm:$0x1]
    %v171 = vperm.slane %v169, 0
    %v181 = vunpack.c.l.b16 %v161
    %v182 = vunpack.c.l.b16 %v162
    %v183 = vunpack.c.l.b16 %v163
    %v184 = vunpack.c.l.b16 %v164
    %v185 = vunpack.c.l.b16 %v165
    %v186 = vunpack.c.l.b16 %v166
    %v187 = vunpack.c.l.b16 %v167
    %v188 = vunpack.c.l.b16 %v168
    %v189 = vpack.c.b16 %v182, %v181
    %v190 = vpack.c.b16 %v184, %v183
    %v191 = vpack.c.b16 %v186, %v185
    %v192 = vpack.c.b16 %v188, %v187
    %v198 = vsel %vm140, %v160, 0
    %200 = vmatpush.bf16.msra.mxu0 0
    %201 = vmatpush.bf16.msra.mxu0 0
    %202 = vmatpush.bf16.msra.mxu0 0
    %203 = vmatpush.bf16.msra.mxu0 0
    %204 = vmatpush.bf16.msra.mxu0 %v192
    %205 = vmatpush.bf16.msra.mxu0 %v191
    %206 = vmatpush.bf16.msra.mxu0 %v190
    %207 = vmatpush.bf16.msra.mxu0 %v189
    %208 = vmatmul.bf16.gmra.mxu0 %v198
    %v209 = vpop.f32.mrf.mxu0
    %v210 = vadd.f32 %v171, %v209
    %v211 = vpop.f32.mrf.mxu0
    %v212 = vadd.f32 %v171, %v211
    %213 = vdwg.mxu0
    %vm214 = vcmask 130048
    %215 = vst.msk [vmem:[#allocation7] sm:$0xff] %vm214, %v210
    %216 = vst.msk [vmem:[#allocation7 + $0x8] sm:$0xff] %vm214, %v212
    // Predicated region
    $region38: #{tpu_custom_call.1} parent=1 // pred_check
      _
    $region39: #{tpu_custom_call.1} parent=1 // pred_check_branch
      %218 = sbr.rel (0) target = $region41
    $region40: #{tpu_custom_call.1} parent=1 // pred_region
      %220 = vsyncadd [#allocation4], 0
      %s221 = sshll.u32 [#allocation7], 4
      %s222 = int_to_ptr.vmem [resolvable:$true] %s221
      %s223 = sshll.u32 %s7, 4
      %s224 = int_to_ptr.hbm [resolvable:$true] %s223
      %229 = dma.vmem_to_hbm [thread:$0]  %s222, 256, %s224, [#allocation4], 128, 128, 8
    $region41: #{tpu_custom_call.1} parent=1 // pred_fallthru
      _
    // Predicated region
    $region42: #{tpu_custom_call.1} parent=1 // pred_check
      _
    $region43: #{tpu_custom_call.1} parent=1 // pred_check_branch
      %231 = sbr.rel (0) target = $region45
    $region44: #{tpu_custom_call.1} parent=1 // pred_region
      %233 = dma.done [#allocation4], 256
    $region45: #{tpu_custom_call.1} parent=1 // pred_fallthru
      _
    %234 = vsyncpa [#allocation3], 1
    %235 = vsyncpa [#allocation6], 1
    %236 = vsyncpa [#allocation4], 1

</llo_original>
